<compile_context>
chip_gen: v5e
topology: v5e:2x2
jax: 0.10.0
libtpu: 0.0.40
codegen_flags: <defaults>
</compile_context>

<pallas_src>
import jax
import jax.numpy as jnp
from jax.experimental import pallas as pl
from jax.experimental.pallas import tpu as pltpu

INPUT_DIM = 64
D_MODEL = 256


def _round_up(x, m):
    return (x + m - 1) // m * m


def expert_kernel(x_ref, w1_ref, b1_ref, w2_ref, b2_ref, o_ref):
    # x_ref:  (tile_b, input_dim)   x.dtype (e.g. f32)  VMEM
    # w1_ref: (input_dim, d_model)  bf16
    # b1_ref: (1, d_model)          f32
    # w2_ref: (d_model, d_model)    bf16
    # b2_ref: (1, d_model)          f32
    # o_ref:  (tile_b, d_model)     out dtype
    #
    # In-kernel cast to the matmul dtype (free VPU work in this DMA-bound loop).
    x = x_ref[...].astype(w1_ref.dtype)
    # fc1 + bias + ReLU; f32 accumulation on the MXU, bias/ReLU at f32.
    h = jnp.dot(x, w1_ref[...], preferred_element_type=jnp.float32) + b1_ref[...]
    h = jnp.maximum(h, 0.0)
    # Back to bf16 for the second MXU pass (fc2), still f32 accumulation.
    h = h.astype(w2_ref.dtype)
    y = jnp.dot(h, w2_ref[...], preferred_element_type=jnp.float32) + b2_ref[...]
    o_ref[...] = y.astype(o_ref.dtype)


def expert_forward(x, w1, b1, w2, b2, *, tb=4096, compute_dtype=jnp.bfloat16,
                   out_dtype=None):
    """fc2(relu(fc1(x))).  x: (B, input_dim); weights pre-transposed [in, out].

    out_dtype=None keeps x.dtype (torch-module semantics); pass jnp.bfloat16 to
    halve output writeback bytes if downstream can accept it.
    """
    B, in_dim = x.shape
    d_model = w1.shape[1]
    out_dtype = x.dtype if out_dtype is None else out_dtype

    # Weights in bf16 for the MXU; biases stay f32 so the adds happen at
    # accumulator precision.  x is NOT cast here (cast happens in-kernel).
    w1c = w1.astype(compute_dtype)
    w2c = w2.astype(compute_dtype)
    b1f = b1.reshape(1, d_model).astype(jnp.float32)
    b2f = b2.reshape(1, d_model).astype(jnp.float32)

    # Batch tile: at most `tb` rows, a multiple of 8 (sublane), and small enough
    # that the grid has >= 4 steps when B allows (>= 2 per v7x TensorCore).
    # Pad B up to a multiple of the tile (padded rows compute garbage that is
    # sliced off below).
    tile_b = min(_round_up(max(pl.cdiv(B, 4), 8), 8), _round_up(tb, 8))
    b_pad = _round_up(B, tile_b)
    xp = x if b_pad == B else jnp.pad(x, ((0, b_pad - B), (0, 0)))
    grid = (b_pad // tile_b,)

    w_itemsize = jnp.dtype(compute_dtype).itemsize
    cost = pl.CostEstimate(
        flops=2 * b_pad * (in_dim * d_model + d_model * d_model),
        transcendentals=0,
        bytes_accessed=(
            b_pad * in_dim * jnp.dtype(x.dtype).itemsize               # x
            + (in_dim * d_model + d_model * d_model) * w_itemsize      # W1, W2
            + 2 * d_model * 4                                          # biases (f32)
            + b_pad * d_model * jnp.dtype(out_dtype).itemsize          # y
        ),
    )

    return pl.pallas_call(
        expert_kernel,
        out_shape=jax.ShapeDtypeStruct((b_pad, d_model), out_dtype),
        grid_spec=pltpu.PrefetchScalarGridSpec(
            num_scalar_prefetch=0,
            grid=grid,
            in_specs=[
                pl.BlockSpec((tile_b, in_dim), lambda i: (i, 0)),    # x tile (streamed)
                pl.BlockSpec((in_dim, d_model), lambda i: (0, 0)),   # W1 (resident)
                pl.BlockSpec((1, d_model), lambda i: (0, 0)),        # b1
                pl.BlockSpec((d_model, d_model), lambda i: (0, 0)),  # W2 (resident)
                pl.BlockSpec((1, d_model), lambda i: (0, 0)),        # b2
            ],
            out_specs=pl.BlockSpec((tile_b, d_model), lambda i: (i, 0)),
        ),
        compiler_params=pltpu.CompilerParams(
            dimension_semantics=("parallel",),  # batch tiles are independent
        ),
        cost_estimate=cost,
    )(xp, w1c, b1f, w2c, b2f)[:B]


def init_params(key, input_dim, d_model, dtype=jnp.float32):
    # Deterministic synthetic init (uniform, torch-Linear-like bound 1/sqrt(fan_in)).
    k1, k2, k3, k4 = jax.random.split(key, 4)
    bound1 = 1.0 / (input_dim ** 0.5)
    bound2 = 1.0 / (d_model ** 0.5)
    w1 = jax.random.uniform(k1, (input_dim, d_model), dtype, -bound1, bound1)
    b1 = jax.random.uniform(k2, (1, d_model), dtype, -bound1, bound1)
    w2 = jax.random.uniform(k3, (d_model, d_model), dtype, -bound2, bound2)
    b2 = jax.random.uniform(k4, (1, d_model), dtype, -bound2, bound2)
    return w1, b1, w2, b2


if __name__ == "__main__":
    key = jax.random.PRNGKey(0)
    kx, kp = jax.random.split(key)

    batch = 200  # not a multiple of 8: exercises padding + the >=4-step grid logic
    x = jax.random.normal(kx, (batch, INPUT_DIM), dtype=jnp.float32)
    w1, b1, w2, b2 = init_params(kp, INPUT_DIM, D_MODEL)

    out = expert_forward(x, w1, b1, w2, b2)
    out = jax.block_until_ready(out)

    # Pure-JAX f32 reference of the same forward pass.  The kernel runs bf16
    # matmuls with f32 accumulation (accepted precision change vs. the f32
    # PyTorch reference), so tolerances are loosened accordingly.
    ref = jnp.maximum(x @ w1 + b1, 0.0) @ w2 + b2
    assert out.shape == (batch, D_MODEL)
    assert out.dtype == x.dtype
    assert jnp.allclose(out, ref, atol=5e-2, rtol=5e-2), float(jnp.max(jnp.abs(out - ref)))

    print("KERNEL_OK")
</pallas_src>

<mosaic_0001>
module attributes {stable_mosaic.version = 11 : i64} {
  func.func @expert_kernel(%arg0: i32, %arg1: memref<56x64xf32, #tpu.memory_space<vmem>>, %arg2: memref<64x256xbf16, #tpu.memory_space<vmem>>, %arg3: memref<1x256xf32, #tpu.memory_space<vmem>>, %arg4: memref<256x256xbf16, #tpu.memory_space<vmem>>, %arg5: memref<1x256xf32, #tpu.memory_space<vmem>>, %arg6: memref<56x256xf32, #tpu.memory_space<vmem>>) attributes {dimension_semantics = [#tpu.dimension_semantics<parallel>], iteration_bounds = array<i64: 4>, scalar_prefetch = 0 : i64, scratch_operands = 0 : i64, tpu.core_type = #tpu.core_type<tc>, window_params = [{transform_indices = @transform_0, window_bounds = array<i64: 56, 64>}, {pipeline_mode = #tpu.pipeline_mode<synchronous>, transform_indices = @transform_1, window_bounds = array<i64: 64, 256>}, {pipeline_mode = #tpu.pipeline_mode<synchronous>, transform_indices = @transform_2, window_bounds = array<i64: 1, 256>}, {pipeline_mode = #tpu.pipeline_mode<synchronous>, transform_indices = @transform_3, window_bounds = array<i64: 256, 256>}, {pipeline_mode = #tpu.pipeline_mode<synchronous>, transform_indices = @transform_4, window_bounds = array<i64: 1, 256>}, {transform_indices = @transform_5, window_bounds = array<i64: 56, 256>}]} {
    %c0 = arith.constant 0 : index
    %c0_0 = arith.constant 0 : index
    %0 = vector.load %arg1[%c0, %c0_0] : memref<56x64xf32, #tpu.memory_space<vmem>>, vector<56x64xf32>
    %1 = arith.truncf %0 : vector<56x64xf32> to vector<56x64xbf16>
    %c0_1 = arith.constant 0 : index
    %c0_2 = arith.constant 0 : index
    %2 = vector.load %arg2[%c0_1, %c0_2] : memref<64x256xbf16, #tpu.memory_space<vmem>>, vector<64x256xbf16>
    %cst = arith.constant dense<0.000000e+00> : vector<56x256xf32>
    %3 = tpu.matmul %1, %2, %cst {dimension_numbers = #tpu.dot_dimension_numbers<[1], [0], [0], [1], [0, 0, 1, 1], [], []>} : vector<56x64xbf16>, vector<64x256xbf16>, vector<56x256xf32> -> vector<56x256xf32>
    %c0_3 = arith.constant 0 : index
    %c0_4 = arith.constant 0 : index
    %4 = vector.load %arg3[%c0_3, %c0_4] : memref<1x256xf32, #tpu.memory_space<vmem>>, vector<1x256xf32>
    %5 = vector.broadcast %4 : vector<1x256xf32> to vector<56x256xf32>
    %6 = arith.addf %3, %5 : vector<56x256xf32>
    %cst_5 = arith.constant 0.000000e+00 : f32
    %7 = vector.broadcast %cst_5 : f32 to vector<56x256xf32>
    %8 = arith.maximumf %6, %7 : vector<56x256xf32>
    %9 = arith.truncf %8 : vector<56x256xf32> to vector<56x256xbf16>
    %c0_6 = arith.constant 0 : index
    %c0_7 = arith.constant 0 : index
    %10 = vector.load %arg4[%c0_6, %c0_7] : memref<256x256xbf16, #tpu.memory_space<vmem>>, vector<256x256xbf16>
    %cst_8 = arith.constant dense<0.000000e+00> : vector<56x256xf32>
    %11 = tpu.matmul %9, %10, %cst_8 {dimension_numbers = #tpu.dot_dimension_numbers<[1], [0], [0], [1], [0, 0, 1, 1], [], []>} : vector<56x256xbf16>, vector<256x256xbf16>, vector<56x256xf32> -> vector<56x256xf32>
    %c0_9 = arith.constant 0 : index
    %c0_10 = arith.constant 0 : index
    %12 = vector.load %arg5[%c0_9, %c0_10] : memref<1x256xf32, #tpu.memory_space<vmem>>, vector<1x256xf32>
    %13 = vector.broadcast %12 : vector<1x256xf32> to vector<56x256xf32>
    %14 = arith.addf %11, %13 : vector<56x256xf32>
    %c0_11 = arith.constant 0 : index
    %c0_12 = arith.constant 0 : index
    %15 = vector.load %arg6[%c0_11, %c0_12] : memref<56x256xf32, #tpu.memory_space<vmem>>, vector<56x256xf32>
    tpu.vector_store %arg6[%c0_11, %c0_12], %14 {strides = array<i32>} : memref<56x256xf32, #tpu.memory_space<vmem>>, vector<56x256xf32>,
    return
  }
  func.func @transform_0(%arg0: i32) -> (i32, i32) {
    %c0_i32 = arith.constant 0 : i32
    %c0_i32_0 = arith.constant 0 : i32
    return %arg0, %c0_i32 : i32, i32
  }
  func.func @transform_1(%arg0: i32) -> (i32, i32) {
    %c0_i32 = arith.constant 0 : i32
    %c0_i32_0 = arith.constant 0 : i32
    %c0_i32_1 = arith.constant 0 : i32
    return %c0_i32, %c0_i32_0 : i32, i32
  }
  func.func @transform_2(%arg0: i32) -> (i32, i32) {
    %c0_i32 = arith.constant 0 : i32
    %c0_i32_0 = arith.constant 0 : i32
    %c0_i32_1 = arith.constant 0 : i32
    return %c0_i32, %c0_i32_0 : i32, i32
  }
  func.func @transform_3(%arg0: i32) -> (i32, i32) {
    %c0_i32 = arith.constant 0 : i32
    %c0_i32_0 = arith.constant 0 : i32
    %c0_i32_1 = arith.constant 0 : i32
    return %c0_i32, %c0_i32_0 : i32, i32
  }
  func.func @transform_4(%arg0: i32) -> (i32, i32) {
    %c0_i32 = arith.constant 0 : i32
    %c0_i32_0 = arith.constant 0 : i32
    %c0_i32_1 = arith.constant 0 : i32
    return %c0_i32, %c0_i32_0 : i32, i32
  }
  func.func @transform_5(%arg0: i32) -> (i32, i32) {
    %c0_i32 = arith.constant 0 : i32
    %c0_i32_0 = arith.constant 0 : i32
    return %arg0, %c0_i32 : i32, i32
  }
}

</mosaic_0001>

<llo_original>
// kernel: tpu_custom_call.1
$region0: #{tpu_custom_call.1}
  #allocation0 [shape = 'u32[]', space=smem, size = 0x4, offset = 0x4, fixed_abs, tag = 'smem constant byte address 0x4 - core index']
  #allocation1 [shape = 'u32[72,128]{1,0:T(1,128)}', space=vmem, size = 0x9000, scoped, tag = 'internal scratch']
  %s0 = inlined_call_operand.vmem [shape: f32[224,64], index: 0, kind: input, shape index: {}]
  %s1 = inlined_call_operand.vmem [shape: bf16[64,256], index: 1, kind: input, shape index: {}]
  %s2 = inlined_call_operand.vmem [shape: f32[1,256], index: 2, kind: input, shape index: {}]
  %s3 = inlined_call_operand.vmem [shape: bf16[256,256], index: 3, kind: input, shape index: {}]
  %s4 = inlined_call_operand.vmem [shape: f32[1,256], index: 4, kind: input, shape index: {}]
  %s5 = inlined_call_operand.hbm [shape: f32[224,256], index: 5, kind: output, shape index: {}]
  %s6 = sld [smem:[#allocation0]]
  $region53: #{tpu_custom_call.1} parent=0
    _
  %s8 = ssub.s32 1, %s6
  %s9 = scalar_select 0, %s8, %s6
  $region1: #{tpu_custom_call.1} parent=0
    #allocation2 [shape = 'u8[114688]{0}', space=vmem, size = 0x1c000, scoped, tag = 'output window, operand 0']
    #allocation3 [shape = 's32[2]{0}', space=sflag, size = 0x8, scoped, tag = 'scoped memory for tpu_custom_call.1']
    %10 = vsyncpa [#allocation3], 0
    %s11 = scalar_lea.sflag [#allocation3], 1
    %12 = vsyncpa %s11, 0
    loop: start=0, step=1, limit=6
    $region2: #{tpu_custom_call.1} parent=1 // loop_pre_header
      _
    $region3: #{tpu_custom_call.1} parent=1 // loop_header
      %s14 = sphi 0, %s18
      %p15 = scmp.ge.s32.totalorder %s14, 6
      %s24 = sphi 0, %s26
      %s27 = sphi 0, %s24
      %s28 = sphi 0, %s27
      %s44 = sphi 0, %s28
      %s48 = sphi 0, %s48
      %s50 = sphi 0, %s48
      %s51 = sphi 0, %s50
      %s65 = sphi 0, %s51
      %s69 = sphi 0, %s69
      %s71 = sphi 0, %s69
      %s72 = sphi 0, %s71
      %s86 = sphi 0, %s72
      %s90 = sphi 0, %s90
      %s92 = sphi 0, %s90
      %s93 = sphi 0, %s92
      %s107 = sphi 0, %s93
      %s111 = sphi 0, %s111
      %s113 = sphi 0, %s111
      %s114 = sphi 0, %s113
      %s128 = sphi 0, %s114
      %s134 = sphi 0, %s136
      %s137 = sphi 0, %s134
      %s138 = sphi 0, %s137
      %s154 = sphi 0, %s138
    $region4: #{tpu_custom_call.1} parent=1 // loop_header_branch
      %17 = sbr.rel (%p15) target = $region8
    $region5: #{tpu_custom_call.1} parent=1 // loop_body
      %s19 = ssub.s32 %s14, 1
      %s20 = ssub.s32 %s14, 2
      %s21 = sadd.s32 %s14, 1
      %s22 = ssub.s32 %s14, %s21
      %p23 = scmp.eq.s32.totalorder %s22, 0
      %s25 = sadd.s32 %s24, 1
      %s26 = scalar_select %p23, %s24, %s25
      %p29 = pneg %p23
      %p30 = scmp.eq.s32.totalorder %s14, 3
      %p31 = por %p29, %p30
      %p32 = scmp.ne.s32.totalorder %s24, %s27
      %p33 = scmp.eq.s32.totalorder %s14, 0
      %p34 = por %p32, %p33
      %p35 = scmp.ne.s32.totalorder %s24, %s27
      %p36 = scmp.eq.s32.totalorder %s19, 3
      %p37 = por %p35, %p36
      %p38 = scmp.ne.s32.totalorder %s27, %s28
      %p39 = scmp.eq.s32.totalorder %s19, 0
      %p40 = por %p38, %p39
      %p41 = scmp.ne.s32.totalorder %s27, %s28
      %p42 = scmp.eq.s32.totalorder %s20, 3
      %p43 = por %p41, %p42
      %p45 = scmp.ne.s32.totalorder %s28, %s44
      %p46 = scmp.eq.s32.totalorder %s20, 0
      %p47 = por %p45, %p46
      %s49 = sadd.s32 %s48, 1
      %p52 = scmp.eq.s32.totalorder %s14, 3
      %p53 = scmp.ne.s32.totalorder %s48, %s50
      %p54 = scmp.eq.s32.totalorder %s14, 0
      %p55 = por %p53, %p54
      %p56 = scmp.ne.s32.totalorder %s48, %s50
      %p57 = scmp.eq.s32.totalorder %s19, 3
      %p58 = por %p56, %p57
      %p59 = scmp.ne.s32.totalorder %s50, %s51
      %p60 = scmp.eq.s32.totalorder %s19, 0
      %p61 = por %p59, %p60
      %p62 = scmp.ne.s32.totalorder %s50, %s51
      %p63 = scmp.eq.s32.totalorder %s20, 3
      %p64 = por %p62, %p63
      %p66 = scmp.ne.s32.totalorder %s51, %s65
      %p67 = scmp.eq.s32.totalorder %s20, 0
      %p68 = por %p66, %p67
      %s70 = sadd.s32 %s69, 1
      %p73 = scmp.eq.s32.totalorder %s14, 3
      %p74 = scmp.ne.s32.totalorder %s69, %s71
      %p75 = scmp.eq.s32.totalorder %s14, 0
      %p76 = por %p74, %p75
      %p77 = scmp.ne.s32.totalorder %s69, %s71
      %p78 = scmp.eq.s32.totalorder %s19, 3
      %p79 = por %p77, %p78
      %p80 = scmp.ne.s32.totalorder %s71, %s72
      %p81 = scmp.eq.s32.totalorder %s19, 0
      %p82 = por %p80, %p81
      %p83 = scmp.ne.s32.totalorder %s71, %s72
      %p84 = scmp.eq.s32.totalorder %s20, 3
      %p85 = por %p83, %p84
      %p87 = scmp.ne.s32.totalorder %s72, %s86
      %p88 = scmp.eq.s32.totalorder %s20, 0
      %p89 = por %p87, %p88
      %s91 = sadd.s32 %s90, 1
      %p94 = scmp.eq.s32.totalorder %s14, 3
      %p95 = scmp.ne.s32.totalorder %s90, %s92
      %p96 = scmp.eq.s32.totalorder %s14, 0
      %p97 = por %p95, %p96
      %p98 = scmp.ne.s32.totalorder %s90, %s92
      %p99 = scmp.eq.s32.totalorder %s19, 3
      %p100 = por %p98, %p99
      %p101 = scmp.ne.s32.totalorder %s92, %s93
      %p102 = scmp.eq.s32.totalorder %s19, 0
      %p103 = por %p101, %p102
      %p104 = scmp.ne.s32.totalorder %s92, %s93
      %p105 = scmp.eq.s32.totalorder %s20, 3
      %p106 = por %p104, %p105
      %p108 = scmp.ne.s32.totalorder %s93, %s107
      %p109 = scmp.eq.s32.totalorder %s20, 0
      %p110 = por %p108, %p109
      %s112 = sadd.s32 %s111, 1
      %p115 = scmp.eq.s32.totalorder %s14, 3
      %p116 = scmp.ne.s32.totalorder %s111, %s113
      %p117 = scmp.eq.s32.totalorder %s14, 0
      %p118 = por %p116, %p117
      %p119 = scmp.ne.s32.totalorder %s111, %s113
      %p120 = scmp.eq.s32.totalorder %s19, 3
      %p121 = por %p119, %p120
      %p122 = scmp.ne.s32.totalorder %s113, %s114
      %p123 = scmp.eq.s32.totalorder %s19, 0
      %p124 = por %p122, %p123
      %p125 = scmp.ne.s32.totalorder %s113, %s114
      %p126 = scmp.eq.s32.totalorder %s20, 3
      %p127 = por %p125, %p126
      %p129 = scmp.ne.s32.totalorder %s114, %s128
      %p130 = scmp.eq.s32.totalorder %s20, 0
      %p131 = por %p129, %p130
      %s132 = ssub.s32 %s14, %s21
      %p133 = scmp.eq.s32.totalorder %s132, 0
      %s135 = sadd.s32 %s134, 1
      %s136 = scalar_select %p133, %s134, %s135
      %p139 = pneg %p133
      %p140 = scmp.eq.s32.totalorder %s14, 3
      %p141 = por %p139, %p140
      %p142 = scmp.ne.s32.totalorder %s134, %s137
      %p143 = scmp.eq.s32.totalorder %s14, 0
      %p144 = por %p142, %p143
      %p145 = scmp.ne.s32.totalorder %s134, %s137
      %p146 = scmp.eq.s32.totalorder %s19, 3
      %p147 = por %p145, %p146
      %p148 = scmp.ne.s32.totalorder %s137, %s138
      %p149 = scmp.eq.s32.totalorder %s19, 0
      %p150 = por %p148, %p149
      %p151 = scmp.ne.s32.totalorder %s137, %s138
      %p152 = scmp.eq.s32.totalorder %s20, 3
      %p153 = por %p151, %p152
      %p155 = scmp.ne.s32.totalorder %s138, %s154
      %p156 = scmp.eq.s32.totalorder %s20, 0
      %p157 = por %p155, %p156
      %p158 = scmp.le.s32.totalorder 1, %s14
      %p159 = scmp.lt.s32.totalorder %s14, 5
      %p160 = pnand %p158, %p159
      %p161 = pneg %p160
      // Predicated region
      $region9: #{tpu_custom_call.1} parent=5 // pred_check
        _
      $region10: #{tpu_custom_call.1} parent=5 // pred_check_branch
        %163 = sbr.rel (%p160) target = $region12
      $region11: #{tpu_custom_call.1} parent=5 // pred_region
        %s164 = ssub.s32 %s14, 1
        // Predicated region
        $region13: #{tpu_custom_call.1} parent=11 // pred_check
          %p165 = pneg %p61
        $region14: #{tpu_custom_call.1} parent=11 // pred_check_branch
          %167 = sbr.rel (%p165) target = $region16
        $region15: #{tpu_custom_call.1} parent=11 // pred_region
          _
        $region16: #{tpu_custom_call.1} parent=11 // pred_fallthru
          _
        // Predicated region
        $region17: #{tpu_custom_call.1} parent=11 // pred_check
          %p168 = pneg %p82
        $region18: #{tpu_custom_call.1} parent=11 // pred_check_branch
          %170 = sbr.rel (%p168) target = $region20
        $region19: #{tpu_custom_call.1} parent=11 // pred_region
          _
        $region20: #{tpu_custom_call.1} parent=11 // pred_fallthru
          _
        // Predicated region
        $region21: #{tpu_custom_call.1} parent=11 // pred_check
          %p171 = pneg %p103
        $region22: #{tpu_custom_call.1} parent=11 // pred_check_branch
          %173 = sbr.rel (%p171) target = $region24
        $region23: #{tpu_custom_call.1} parent=11 // pred_region
          _
        $region24: #{tpu_custom_call.1} parent=11 // pred_fallthru
          _
        // Predicated region
        $region25: #{tpu_custom_call.1} parent=11 // pred_check
          %p174 = pneg %p124
        $region26: #{tpu_custom_call.1} parent=11 // pred_check_branch
          %176 = sbr.rel (%p174) target = $region28
        $region27: #{tpu_custom_call.1} parent=11 // pred_region
          _
        $region28: #{tpu_custom_call.1} parent=11 // pred_fallthru
          _
      $region12: #{tpu_custom_call.1} parent=5 // pred_fallthru
        _
      %p177 = scmp.lt.s32.totalorder %s14, 4
      // Predicated region
      $region29: #{tpu_custom_call.1} parent=5 // pred_check
        %p178 = pneg %p177
      $region30: #{tpu_custom_call.1} parent=5 // pred_check_branch
        %180 = sbr.rel (%p178) target = $region32
      $region31: #{tpu_custom_call.1} parent=5 // pred_region
        // Predicated region
        $region33: #{tpu_custom_call.1} parent=31 // pred_check
          %p181 = pneg %p34
        $region34: #{tpu_custom_call.1} parent=31 // pred_check_branch
          %183 = sbr.rel (%p181) target = $region36
        $region35: #{tpu_custom_call.1} parent=31 // pred_region
          %s184 = smul.u32 7, %s14
          %p185 = scmp.lt.s32.totalorder %s184, 27
          %s186 = scalar_select %p185, %s184, 27
          %s187 = smul.addr %s186, 8
          %s188 = scalar_lea.vmem %s0, %s187
          %s189 = smul.u32 7, %s14
        $region36: #{tpu_custom_call.1} parent=31 // pred_fallthru
          _
      $region32: #{tpu_custom_call.1} parent=5 // pred_fallthru
        _
      %p190 = scmp.le.s32.totalorder 1, %s14
      %p191 = scmp.lt.s32.totalorder %s14, 5
      %p192 = pnand %p190, %p191
      %p193 = pneg %p192
      // Predicated region
      $region37: #{tpu_custom_call.1} parent=5 // pred_check
        _
      $region38: #{tpu_custom_call.1} parent=5 // pred_check_branch
        %195 = sbr.rel (%p192) target = $region40
      $region39: #{tpu_custom_call.1} parent=5 // pred_region
        %s196 = ssub.s32 %s14, 1
        %s197 = smul.u32 7, %s19
        %p198 = scmp.lt.s32.totalorder %s197, 27
        %s199 = scalar_select %p198, %s197, 27
        %s200 = smul.addr %s199, 8
        %s201 = scalar_lea.vmem %s0, %s200
        %p202 = pneg %p40
        %p203 = pneg %p37
        %p204 = pneg %p61
        %p205 = pneg %p58
        %p206 = pneg %p82
        %p207 = pneg %p79
        %p208 = pneg %p103
        %p209 = pneg %p100
        %p210 = pneg %p124
        %p211 = pneg %p121
        %p212 = pneg %p150
        %p213 = pneg %p147
        %s214 = sand.u32 %s137, 1
        %s215 = scalar_lea.sflag [#allocation3], %s214
        %s216 = sand.u32 %s137, 1
        %s217 = smul.addr %s216, 112
        %s218 = scalar_lea.vmem [#allocation2], %s217
        %s219 = smul.u32 7, %s19
        %p220 = scmp.lt.s32.totalorder %s219, 27
        %s221 = scalar_select %p220, %s219, 27
        %s222 = smul.addr %s221, 8
        %s223 = scalar_lea.vmem %s0, %s222
        %s224 = smul.u32 7, %s19
        %s225 = smul.u32 7, %s19
        %v227 = vld [vmem:[%s223] sm:$0xff]
        %v228 = vld [vmem:[%s223 + $0x8] sm:$0xff]
        %v229 = vld [vmem:[%s223 + $0x10] sm:$0xff]
        %v230 = vld [vmem:[%s223 + $0x18] sm:$0xff]
        %v231 = vld [vmem:[%s223 + $0x20] sm:$0xff]
        %v232 = vld [vmem:[%s223 + $0x28] sm:$0xff]
        %v233 = vld [vmem:[%s223 + $0x30] sm:$0xff]
        %v234 = vpack.c.bf16 %v228, %v227
        %v235 = vpack.c.bf16 %v230, %v229
        %v236 = vpack.c.bf16 %v232, %v231
        %v237 = vpack.c.bf16 %v233, %v233
        %v238 = vld [vmem:[%s1] sm:$0xff]
        %v239 = vld [vmem:[%s1 + $0x8] sm:$0xff]
        %v240 = vld [vmem:[%s1 + $0x10] sm:$0xff]
        %v241 = vld [vmem:[%s1 + $0x18] sm:$0xff]
        %v242 = vld [vmem:[%s1 + $0x20] sm:$0xff]
        %v243 = vld [vmem:[%s1 + $0x28] sm:$0xff]
        %v244 = vld [vmem:[%s1 + $0x30] sm:$0xff]
        %v245 = vld [vmem:[%s1 + $0x38] sm:$0xff]
        %v246 = vld [vmem:[%s2] sm:$0x3]
        %v248 = vperm.slane %v246, 0
        %v249 = vperm.slane %v246, 1
        %v260 = vunpack.c.l.b16 %v238
        %v261 = vunpack.c.h.b16 %v238
        %v262 = vunpack.c.l.b16 %v239
        %v263 = vunpack.c.h.b16 %v239
        %v264 = vunpack.c.l.b16 %v240
        %v265 = vunpack.c.h.b16 %v240
        %v266 = vunpack.c.l.b16 %v241
        %v267 = vunpack.c.h.b16 %v241
        %v268 = vunpack.c.l.b16 %v242
        %v269 = vunpack.c.h.b16 %v242
        %v270 = vunpack.c.l.b16 %v243
        %v271 = vunpack.c.h.b16 %v243
        %v272 = vunpack.c.l.b16 %v244
        %v273 = vunpack.c.h.b16 %v244
        %v274 = vunpack.c.l.b16 %v245
        %v275 = vunpack.c.h.b16 %v245
        %v276 = vpack.c.b16 %v262, %v260
        %v277 = vpack.c.b16 %v263, %v261
        %v278 = vpack.c.b16 %v266, %v264
        %v279 = vpack.c.b16 %v267, %v265
        %v280 = vpack.c.b16 %v270, %v268
        %v281 = vpack.c.b16 %v271, %v269
        %v282 = vpack.c.b16 %v274, %v272
        %v283 = vpack.c.b16 %v275, %v273
        %vm292 = vcmask 523264
        %v294 = vsel %vm292, %v234, 0
        %v297 = vsel %vm292, %v235, 0
        %v300 = vsel %vm292, %v236, 0
        %v303 = vsel %vm292, %v237, 0
        %305 = vmatpush.bf16.msra.mxu0 0
        %306 = vmatpush.bf16.msra.mxu0 0
        %307 = vmatpush.bf16.msra.mxu0 0
        %308 = vmatpush.bf16.msra.mxu0 0
        %309 = vmatpush.bf16.msra.mxu0 %v282
        %310 = vmatpush.bf16.msra.mxu0 %v280
        %311 = vmatpush.bf16.msra.mxu0 %v278
        %312 = vmatpush.bf16.msra.mxu0 %v276
        %313 = vmatmul.bf16.gmra.mxu0 %v294
        %v314 = vpop.f32.mrf.mxu0
        %v315 = vadd.f32 %v248, %v314
        %v316 = vpop.f32.mrf.mxu0
        %v317 = vadd.f32 %v248, %v316
        %318 = vmatmul.bf16.gmra.mxu0 %v297
        %v319 = vpop.f32.mrf.mxu0
        %v320 = vadd.f32 %v248, %v319
        %v321 = vpop.f32.mrf.mxu0
        %v322 = vadd.f32 %v248, %v321
        %323 = vmatmul.bf16.gmra.mxu0 %v300
        %v324 = vpop.f32.mrf.mxu0
        %v325 = vadd.f32 %v248, %v324
        %v326 = vpop.f32.mrf.mxu0
        %v327 = vadd.f32 %v248, %v326
        %328 = vmatmul.bf16.gmra.mxu0 %v303
        %v329 = vpop.f32.mrf.mxu0
        %v330 = vadd.f32 %v248, %v329
        %v331 = vpop.f32.mrf.mxu0
        %332 = vdwg.mxu0
        %333 = vmatpush.bf16.msra.mxu0 0
        %334 = vmatpush.bf16.msra.mxu0 0
        %335 = vmatpush.bf16.msra.mxu0 0
        %336 = vmatpush.bf16.msra.mxu0 0
        %337 = vmatpush.bf16.msra.mxu0 %v283
        %338 = vmatpush.bf16.msra.mxu0 %v281
        %339 = vmatpush.bf16.msra.mxu0 %v279
        %340 = vmatpush.bf16.msra.mxu0 %v277
        %341 = vmatmul.bf16.gmra.mxu0 %v294
        %v342 = vpop.f32.mrf.mxu0
        %v343 = vadd.f32 %v249, %v342
        %v344 = vpop.f32.mrf.mxu0
        %v345 = vadd.f32 %v249, %v344
        %346 = vmatmul.bf16.gmra.mxu0 %v297
        %v347 = vpop.f32.mrf.mxu0
        %v348 = vadd.f32 %v249, %v347
        %v349 = vpop.f32.mrf.mxu0
        %v350 = vadd.f32 %v249, %v349
        %351 = vmatmul.bf16.gmra.mxu0 %v300
        %v352 = vpop.f32.mrf.mxu0
        %v353 = vadd.f32 %v249, %v352
        %v354 = vpop.f32.mrf.mxu0
        %v355 = vadd.f32 %v249, %v354
        %356 = vmatmul.bf16.gmra.mxu0 %v303
        %v357 = vpop.f32.mrf.mxu0
        %v358 = vadd.f32 %v249, %v357
        %v359 = vpop.f32.mrf.mxu0
        %360 = vdwg.mxu0
        %v361 = vmax.f32 %v315, 0.0
        %v362 = vmax.f32 %v343, 0.0
        %v363 = vmax.f32 %v317, 0.0
        %v364 = vmax.f32 %v345, 0.0
        %v365 = vmax.f32 %v320, 0.0
        %v366 = vmax.f32 %v348, 0.0
        %v367 = vmax.f32 %v322, 0.0
        %v368 = vmax.f32 %v350, 0.0
        %v369 = vmax.f32 %v325, 0.0
        %v370 = vmax.f32 %v353, 0.0
        %v371 = vmax.f32 %v327, 0.0
        %v372 = vmax.f32 %v355, 0.0
        %v373 = vmax.f32 %v330, 0.0
        %v374 = vmax.f32 %v358, 0.0
        %v375 = vpack.c.bf16 %v363, %v361
        %v376 = vpack.c.bf16 %v364, %v362
        %v377 = vpack.c.bf16 %v367, %v365
        %v378 = vpack.c.bf16 %v368, %v366
        %v379 = vpack.c.bf16 %v371, %v369
        %v380 = vpack.c.bf16 %v372, %v370
        %v381 = vpack.c.bf16 %v373, %v373
        %v382 = vpack.c.bf16 %v374, %v374
        %v383 = vld [vmem:[%s3] sm:$0xff]
        %v384 = vld [vmem:[%s3 + $0x8] sm:$0xff]
        %v385 = vld [vmem:[%s3 + $0x10] sm:$0xff]
        %v386 = vld [vmem:[%s3 + $0x18] sm:$0xff]
        %v387 = vld [vmem:[%s3 + $0x20] sm:$0xff]
        %v388 = vld [vmem:[%s3 + $0x28] sm:$0xff]
        %v389 = vld [vmem:[%s3 + $0x30] sm:$0xff]
        %v390 = vld [vmem:[%s3 + $0x38] sm:$0xff]
        %v391 = vld [vmem:[%s3 + $0x40] sm:$0xff]
        %v392 = vld [vmem:[%s3 + $0x48] sm:$0xff]
        %v393 = vld [vmem:[%s3 + $0x50] sm:$0xff]
        %v394 = vld [vmem:[%s3 + $0x58] sm:$0xff]
        %v395 = vld [vmem:[%s3 + $0x60] sm:$0xff]
        %v396 = vld [vmem:[%s3 + $0x68] sm:$0xff]
        %v397 = vld [vmem:[%s3 + $0x70] sm:$0xff]
        %v398 = vld [vmem:[%s3 + $0x78] sm:$0xff]
        %v399 = vld [vmem:[%s3 + $0x80] sm:$0xff]
        %v400 = vld [vmem:[%s3 + $0x88] sm:$0xff]
        %v401 = vld [vmem:[%s3 + $0x90] sm:$0xff]
        %v402 = vld [vmem:[%s3 + $0x98] sm:$0xff]
        %v403 = vld [vmem:[%s3 + $0xa0] sm:$0xff]
        %v404 = vld [vmem:[%s3 + $0xa8] sm:$0xff]
        %v405 = vld [vmem:[%s3 + $0xb0] sm:$0xff]
        %v406 = vld [vmem:[%s3 + $0xb8] sm:$0xff]
        %v407 = vld [vmem:[%s3 + $0xc0] sm:$0xff]
        %v408 = vld [vmem:[%s3 + $0xc8] sm:$0xff]
        %v409 = vld [vmem:[%s3 + $0xd0] sm:$0xff]
        %v410 = vld [vmem:[%s3 + $0xd8] sm:$0xff]
        %v411 = vld [vmem:[%s3 + $0xe0] sm:$0xff]
        %v412 = vld [vmem:[%s3 + $0xe8] sm:$0xff]
        %v413 = vld [vmem:[%s3 + $0xf0] sm:$0xff]
        %v414 = vld [vmem:[%s3 + $0xf8] sm:$0xff]
        %v415 = vld [vmem:[%s4] sm:$0x3]
        %v417 = vperm.slane %v415, 0
        %v418 = vperm.slane %v415, 1
        %v453 = vunpack.c.l.b16 %v383
        %v454 = vunpack.c.h.b16 %v383
        %v455 = vunpack.c.l.b16 %v384
        %v456 = vunpack.c.h.b16 %v384
        %v457 = vunpack.c.l.b16 %v385
        %v458 = vunpack.c.h.b16 %v385
        %v459 = vunpack.c.l.b16 %v386
        %v460 = vunpack.c.h.b16 %v386
        %v461 = vunpack.c.l.b16 %v387
        %v462 = vunpack.c.h.b16 %v387
        %v463 = vunpack.c.l.b16 %v388
        %v464 = vunpack.c.h.b16 %v388
        %v465 = vunpack.c.l.b16 %v389
        %v466 = vunpack.c.h.b16 %v389
        %v467 = vunpack.c.l.b16 %v390
        %v468 = vunpack.c.h.b16 %v390
        %v469 = vunpack.c.l.b16 %v391
        %v470 = vunpack.c.h.b16 %v391
        %v471 = vunpack.c.l.b16 %v392
        %v472 = vunpack.c.h.b16 %v392
        %v473 = vunpack.c.l.b16 %v393
        %v474 = vunpack.c.h.b16 %v393
        %v475 = vunpack.c.l.b16 %v394
        %v476 = vunpack.c.h.b16 %v394
        %v477 = vunpack.c.l.b16 %v395
        %v478 = vunpack.c.h.b16 %v395
        %v479 = vunpack.c.l.b16 %v396
        %v480 = vunpack.c.h.b16 %v396
        %v481 = vunpack.c.l.b16 %v397
        %v482 = vunpack.c.h.b16 %v397
        %v483 = vunpack.c.l.b16 %v398
        %v484 = vunpack.c.h.b16 %v398
        %v485 = vunpack.c.l.b16 %v399
        %v486 = vunpack.c.h.b16 %v399
        %v487 = vunpack.c.l.b16 %v400
        %v488 = vunpack.c.h.b16 %v400
        %v489 = vunpack.c.l.b16 %v401
        %v490 = vunpack.c.h.b16 %v401
        %v491 = vunpack.c.l.b16 %v402
        %v492 = vunpack.c.h.b16 %v402
        %v493 = vunpack.c.l.b16 %v403
        %v494 = vunpack.c.h.b16 %v403
        %v495 = vunpack.c.l.b16 %v404
        %v496 = vunpack.c.h.b16 %v404
        %v497 = vunpack.c.l.b16 %v405
        %v498 = vunpack.c.h.b16 %v405
        %v499 = vunpack.c.l.b16 %v406
        %v500 = vunpack.c.h.b16 %v406
        %v501 = vunpack.c.l.b16 %v407
        %v502 = vunpack.c.h.b16 %v407
        %v503 = vunpack.c.l.b16 %v408
        %v504 = vunpack.c.h.b16 %v408
        %v505 = vunpack.c.l.b16 %v409
        %v506 = vunpack.c.h.b16 %v409
        %v507 = vunpack.c.l.b16 %v410
        %v508 = vunpack.c.h.b16 %v410
        %v509 = vunpack.c.l.b16 %v411
        %v510 = vunpack.c.h.b16 %v411
        %v511 = vunpack.c.l.b16 %v412
        %v512 = vunpack.c.h.b16 %v412
        %v513 = vunpack.c.l.b16 %v413
        %v514 = vunpack.c.h.b16 %v413
        %v515 = vunpack.c.l.b16 %v414
        %v516 = vunpack.c.h.b16 %v414
        %v517 = vpack.c.b16 %v455, %v453
        %v518 = vpack.c.b16 %v456, %v454
        %v519 = vpack.c.b16 %v459, %v457
        %v520 = vpack.c.b16 %v460, %v458
        %v521 = vpack.c.b16 %v463, %v461
        %v522 = vpack.c.b16 %v464, %v462
        %v523 = vpack.c.b16 %v467, %v465
        %v524 = vpack.c.b16 %v468, %v466
        %v525 = vpack.c.b16 %v471, %v469
        %v526 = vpack.c.b16 %v472, %v470
        %v527 = vpack.c.b16 %v475, %v473
        %v528 = vpack.c.b16 %v476, %v474
        %v529 = vpack.c.b16 %v479, %v477
        %v530 = vpack.c.b16 %v480, %v478
        %v531 = vpack.c.b16 %v483, %v481
        %v532 = vpack.c.b16 %v484, %v482
        %v533 = vpack.c.b16 %v487, %v485
        %v534 = vpack.c.b16 %v488, %v486
        %v535 = vpack.c.b16 %v491, %v489
        %v536 = vpack.c.b16 %v492, %v490
        %v537 = vpack.c.b16 %v495, %v493
        %v538 = vpack.c.b16 %v496, %v494
        %v539 = vpack.c.b16 %v499, %v497
        %v540 = vpack.c.b16 %v500, %v498
        %v541 = vpack.c.b16 %v503, %v501
        %v542 = vpack.c.b16 %v504, %v502
        %v543 = vpack.c.b16 %v507, %v505
        %v544 = vpack.c.b16 %v508, %v506
        %v545 = vpack.c.b16 %v511, %v509
        %v546 = vpack.c.b16 %v512, %v510
        %v547 = vpack.c.b16 %v515, %v513
        %v548 = vpack.c.b16 %v516, %v514
        %581 = vmatpush.bf16.msra.mxu0 %v531
        %582 = vmatpush.bf16.msra.mxu0 %v529
        %583 = vmatpush.bf16.msra.mxu0 %v527
        %584 = vmatpush.bf16.msra.mxu0 %v525
        %585 = vmatpush.bf16.msra.mxu0 %v523
        %586 = vmatpush.bf16.msra.mxu0 %v521
        %587 = vmatpush.bf16.msra.mxu0 %v519
        %588 = vmatpush.bf16.msra.mxu0 %v517
        %589 = vmatmul.bf16.gmra.mxu0 %v375
        %v590 = vpop.f32.mrf.mxu0
        %v591 = vadd.f32 %v417, %v590
        %v592 = vpop.f32.mrf.mxu0
        %v593 = vadd.f32 %v417, %v592
        %594 = vmatmul.bf16.gmra.mxu0 %v377
        %v595 = vpop.f32.mrf.mxu0
        %v596 = vadd.f32 %v417, %v595
        %v597 = vpop.f32.mrf.mxu0
        %v598 = vadd.f32 %v417, %v597
        %599 = vmatmul.bf16.gmra.mxu0 %v379
        %v600 = vpop.f32.mrf.mxu0
        %v601 = vadd.f32 %v417, %v600
        %v602 = vpop.f32.mrf.mxu0
        %v603 = vadd.f32 %v417, %v602
        %604 = vmatmul.bf16.gmra.mxu0 %v381
        %v605 = vpop.f32.mrf.mxu0
        %v606 = vadd.f32 %v417, %v605
        %v607 = vpop.f32.mrf.mxu0
        %608 = vdwg.mxu0
        %609 = vmatpush.bf16.msra.mxu0 %v547
        %610 = vmatpush.bf16.msra.mxu0 %v545
        %611 = vmatpush.bf16.msra.mxu0 %v543
        %612 = vmatpush.bf16.msra.mxu0 %v541
        %613 = vmatpush.bf16.msra.mxu0 %v539
        %614 = vmatpush.bf16.msra.mxu0 %v537
        %615 = vmatpush.bf16.msra.mxu0 %v535
        %616 = vmatpush.bf16.msra.mxu0 %v533
        %617 = vmatmul.bf16.gmra.mxu0 %v376
        %v618 = vpop.f32.mrf.mxu0
        %v619 = vadd.f32 %v591, %v618
        %v620 = vpop.f32.mrf.mxu0
        %v621 = vadd.f32 %v593, %v620
        %622 = vmatmul.bf16.gmra.mxu0 %v378
        %v623 = vpop.f32.mrf.mxu0
        %v624 = vadd.f32 %v596, %v623
        %v625 = vpop.f32.mrf.mxu0
        %v626 = vadd.f32 %v598, %v625
        %627 = vmatmul.bf16.gmra.mxu0 %v380
        %v628 = vpop.f32.mrf.mxu0
        %v629 = vadd.f32 %v601, %v628
        %v630 = vpop.f32.mrf.mxu0
        %v631 = vadd.f32 %v603, %v630
        %632 = vmatmul.bf16.gmra.mxu0 %v382
        %v633 = vpop.f32.mrf.mxu0
        %v634 = vadd.f32 %v606, %v633
        %v635 = vpop.f32.mrf.mxu0
        %636 = vdwg.mxu0
        %637 = vmatpush.bf16.msra.mxu0 %v532
        %638 = vmatpush.bf16.msra.mxu0 %v530
        %639 = vmatpush.bf16.msra.mxu0 %v528
        %640 = vmatpush.bf16.msra.mxu0 %v526
        %641 = vmatpush.bf16.msra.mxu0 %v524
        %642 = vmatpush.bf16.msra.mxu0 %v522
        %643 = vmatpush.bf16.msra.mxu0 %v520
        %644 = vmatpush.bf16.msra.mxu0 %v518
        %645 = vmatmul.bf16.gmra.mxu0 %v375
        %v646 = vpop.f32.mrf.mxu0
        %v647 = vadd.f32 %v418, %v646
        %v648 = vpop.f32.mrf.mxu0
        %v649 = vadd.f32 %v418, %v648
        %650 = vmatmul.bf16.gmra.mxu0 %v377
        %v651 = vpop.f32.mrf.mxu0
        %v652 = vadd.f32 %v418, %v651
        %v653 = vpop.f32.mrf.mxu0
        %v654 = vadd.f32 %v418, %v653
        %655 = vmatmul.bf16.gmra.mxu0 %v379
        %v656 = vpop.f32.mrf.mxu0
        %v657 = vadd.f32 %v418, %v656
        %v658 = vpop.f32.mrf.mxu0
        %v659 = vadd.f32 %v418, %v658
        %660 = vmatmul.bf16.gmra.mxu0 %v381
        %v661 = vpop.f32.mrf.mxu0
        %v662 = vadd.f32 %v418, %v661
        %v663 = vpop.f32.mrf.mxu0
        %664 = vdwg.mxu0
        %665 = vmatpush.bf16.msra.mxu0 %v548
        %666 = vmatpush.bf16.msra.mxu0 %v546
        %667 = vmatpush.bf16.msra.mxu0 %v544
        %668 = vmatpush.bf16.msra.mxu0 %v542
        %669 = vmatpush.bf16.msra.mxu0 %v540
        %670 = vmatpush.bf16.msra.mxu0 %v538
        %671 = vmatpush.bf16.msra.mxu0 %v536
        %672 = vmatpush.bf16.msra.mxu0 %v534
        %673 = vmatmul.bf16.gmra.mxu0 %v376
        %v674 = vpop.f32.mrf.mxu0
        %v675 = vadd.f32 %v647, %v674
        %v676 = vpop.f32.mrf.mxu0
        %v677 = vadd.f32 %v649, %v676
        %678 = vmatmul.bf16.gmra.mxu0 %v378
        %v679 = vpop.f32.mrf.mxu0
        %v680 = vadd.f32 %v652, %v679
        %v681 = vpop.f32.mrf.mxu0
        %v682 = vadd.f32 %v654, %v681
        %683 = vmatmul.bf16.gmra.mxu0 %v380
        %v684 = vpop.f32.mrf.mxu0
        %v685 = vadd.f32 %v657, %v684
        %v686 = vpop.f32.mrf.mxu0
        %v687 = vadd.f32 %v659, %v686
        %688 = vmatmul.bf16.gmra.mxu0 %v382
        %v689 = vpop.f32.mrf.mxu0
        %v690 = vadd.f32 %v662, %v689
        %v691 = vpop.f32.mrf.mxu0
        %692 = vdwg.mxu0
        %693 = vst [vmem:[%s218] sm:$0xff] %v619
        %694 = vst [vmem:[%s218 + $0x8] sm:$0xff] %v675
        %695 = vst [vmem:[%s218 + $0x10] sm:$0xff] %v621
        %696 = vst [vmem:[%s218 + $0x18] sm:$0xff] %v677
        %697 = vst [vmem:[%s218 + $0x20] sm:$0xff] %v624
        %698 = vst [vmem:[%s218 + $0x28] sm:$0xff] %v680
        %699 = vst [vmem:[%s218 + $0x30] sm:$0xff] %v626
        %700 = vst [vmem:[%s218 + $0x38] sm:$0xff] %v682
        %701 = vst [vmem:[%s218 + $0x40] sm:$0xff] %v629
        %702 = vst [vmem:[%s218 + $0x48] sm:$0xff] %v685
        %703 = vst [vmem:[%s218 + $0x50] sm:$0xff] %v631
        %704 = vst [vmem:[%s218 + $0x58] sm:$0xff] %v687
        %705 = vst [vmem:[%s218 + $0x60] sm:$0xff] %v634
        %706 = vst [vmem:[%s218 + $0x68] sm:$0xff] %v690
        %s707 = sand.u32 %s137, 1
        %s708 = scalar_lea.sflag [#allocation3], %s707
        %s709 = sand.u32 %s137, 1
        %s710 = smul.addr %s709, 112
        %s711 = scalar_lea.vmem [#allocation2], %s710
        // Predicated region
        $region41: #{tpu_custom_call.1} parent=39 // pred_check
          %p712 = pneg %p147
        $region42: #{tpu_custom_call.1} parent=39 // pred_check_branch
          %714 = sbr.rel (%p712) target = $region44
        $region43: #{tpu_custom_call.1} parent=39 // pred_region
          %s715 = smul.u32 7, %s19
          %717 = vsyncadd %s708, 0
          %s718 = smul.addr %s715, 2
          %s719 = smul.addr %s718, 8
          %s720 = scalar_lea.hbm %s5, %s719
          %s721 = sshll.u32 %s711, 4
          %s722 = int_to_ptr.vmem [resolvable:$true] %s721
          %s723 = sshll.u32 %s720, 4
          %s724 = int_to_ptr.hbm [resolvable:$true] %s723
          %729 = dma.vmem_to_hbm [thread:$0]  %s722, 1792, %s724, %s708, 256, 256, 16
        $region44: #{tpu_custom_call.1} parent=39 // pred_fallthru
          _
      $region40: #{tpu_custom_call.1} parent=5 // pred_fallthru
        _
      %p730 = scmp.le.s32.totalorder 2, %s14
      // Predicated region
      $region45: #{tpu_custom_call.1} parent=5 // pred_check
        %p731 = pneg %p730
      $region46: #{tpu_custom_call.1} parent=5 // pred_check_branch
        %733 = sbr.rel (%p731) target = $region48
      $region47: #{tpu_custom_call.1} parent=5 // pred_region
        %s734 = ssub.s32 %s14, 2
        // Predicated region
        $region49: #{tpu_custom_call.1} parent=47 // pred_check
          %p735 = pneg %p153
        $region50: #{tpu_custom_call.1} parent=47 // pred_check_branch
          %737 = sbr.rel (%p735) target = $region52
        $region51: #{tpu_custom_call.1} parent=47 // pred_region
          %s738 = sand.u32 %s138, 1
          %s739 = scalar_lea.sflag [#allocation3], %s738
          %s740 = sand.u32 %s138, 1
          %s741 = smul.addr %s740, 112
          %s742 = scalar_lea.vmem [#allocation2], %s741
          %744 = dma.done %s739, 1792
        $region52: #{tpu_custom_call.1} parent=47 // pred_fallthru
          _
      $region48: #{tpu_custom_call.1} parent=5 // pred_fallthru
        _
    $region6: #{tpu_custom_call.1} parent=1 // loop_footer
      %s18 = sadd.s32 1, %s14
    $region7: #{tpu_custom_call.1} parent=1 // loop_footer_branch
      %13 = sbr.rel target = $region3
    $region8: #{tpu_custom_call.1} parent=1 // loop_exit
      _
    %745 = vsyncpa [#allocation3], 1
    %s746 = scalar_lea.sflag [#allocation3], 1
    %747 = vsyncpa %s746, 1

</llo_original>
